<compile_context>
chip_gen: v5e
topology: v5e:2x2
jax: 0.10.0
libtpu: 0.0.40
codegen_flags: <defaults>
</compile_context>

<pallas_src>
import jax
import jax.numpy as jnp
from jax.experimental import pallas as pl
from jax.experimental.pallas import tpu as pltpu

LANE = 128
SUBLANE = 8


def _round_up(v, m):
    return ((v + m - 1) // m) * m


def _pad2(x, rows, cols):
    return jnp.pad(x, ((0, rows - x.shape[0]), (0, cols - x.shape[1])))


# ----------------------------- Pallas kernel ------------------------------- #
def _gcn3_kernel(a_ref, x_ref, w1_ref, b1_ref, w2_ref, b2_ref, w3_ref, b3_ref,
                 o_ref):
    bf16 = jnp.bfloat16
    a = a_ref[0]                                    # [M, M] bf16, block-diag (hoisted once)

    # Layer 1: GCNConv(input -> hidden) + ReLU
    h = jnp.dot(x_ref[0], w1_ref[...], preferred_element_type=jnp.float32)
    h = jnp.dot(a, h.astype(bf16), preferred_element_type=jnp.float32)
    h = jnp.maximum(h + b1_ref[...], 0.0)           # f32 elementwise (VPU)

    # Layer 2: GCNConv(hidden -> hidden) + ReLU
    h = jnp.dot(h.astype(bf16), w2_ref[...], preferred_element_type=jnp.float32)
    h = jnp.dot(a, h.astype(bf16), preferred_element_type=jnp.float32)
    h = jnp.maximum(h + b2_ref[...], 0.0)

    # Layer 3: GCNConv(hidden -> output) + Sigmoid
    h = jnp.dot(h.astype(bf16), w3_ref[...], preferred_element_type=jnp.float32)
    h = jnp.dot(a, h.astype(bf16), preferred_element_type=jnp.float32)
    o_ref[0] = jax.nn.sigmoid(h + b3_ref[...])      # lane-dense f32 store (EUP sigmoid)


# ------------------------------- Wrapper ------------------------------------ #
@jax.jit
def ucgcn_forward(a_hat, x, w1, b1, w2, b2, w3, b3):
    """Batched UCGCN forward.

    a_hat: [B, N, N] f32 normalized adjacency, x: [B, N, Fin] f32.
    Returns [B, N, Fout] f32.
    """
    B, N, Fin = x.shape
    H = w1.shape[1]
    Fout = w3.shape[1]

    Np = _round_up(N, SUBLANE)
    Fp = _round_up(Fin, LANE)
    Hp = _round_up(H, LANE)
    Op = _round_up(Fout, LANE)

    # Graphs per grid step: pack enough graphs to fill ~128 MXU rows.
    GB = max(1, min(B, LANE // Np))
    C = pl.cdiv(B, GB)                 # grid steps (chunks)
    Bp = C * GB                        # batch padded to a whole number of chunks
    M = GB * Np                        # rows per chunk (multiple of 8)

    bf16 = jnp.bfloat16
    # Zero-padding is exact: padded feature columns / node rows / phantom
    # graphs stay decoupled through matmul (block-diag A), bias add (bias
    # padded with zeros), ReLU; extras are sliced off below.
    a_p = jnp.pad(a_hat, ((0, Bp - B), (0, Np - N), (0, Np - N)))
    # Block-diagonal adjacency per chunk: [C, M, M].
    a_p = a_p.reshape(C, GB, Np, Np)
    eye_gb = jnp.eye(GB, dtype=a_p.dtype)
    a_bd = jnp.einsum('cgij,gh->cgihj', a_p, eye_gb)
    a_bd = a_bd.reshape(C, M, M).astype(bf16)

    x_p = jnp.pad(x, ((0, Bp - B), (0, Np - N), (0, Fp - Fin)))
    x_p = x_p.reshape(C, M, Fp).astype(bf16)

    w1_p = _pad2(w1, Fp, Hp).astype(bf16)
    w2_p = _pad2(w2, Hp, Hp).astype(bf16)
    w3_p = _pad2(w3, Hp, Op).astype(bf16)
    b1_p = _pad2(b1, 1, Hp).astype(jnp.float32)
    b2_p = _pad2(b2, 1, Hp).astype(jnp.float32)
    b3_p = _pad2(b3, 1, Op).astype(jnp.float32)

    out = pl.pallas_call(
        _gcn3_kernel,
        out_shape=jax.ShapeDtypeStruct((C, M, Op), jnp.float32),
        grid=(C,),
        in_specs=[
            pl.BlockSpec((1, M, M), lambda c: (c, 0, 0)),     # block-diag A_hat
            pl.BlockSpec((1, M, Fp), lambda c: (c, 0, 0)),    # packed features
            pl.BlockSpec((Fp, Hp), lambda c: (0, 0)),         # w1 (shared)
            pl.BlockSpec((1, Hp), lambda c: (0, 0)),          # b1
            pl.BlockSpec((Hp, Hp), lambda c: (0, 0)),         # w2
            pl.BlockSpec((1, Hp), lambda c: (0, 0)),          # b2
            pl.BlockSpec((Hp, Op), lambda c: (0, 0)),         # w3
            pl.BlockSpec((1, Op), lambda c: (0, 0)),          # b3
        ],
        out_specs=pl.BlockSpec((1, M, Op), lambda c: (c, 0, 0)),
        compiler_params=pltpu.CompilerParams(
            dimension_semantics=("parallel",)),               # megacore / 2nd TC
    )(a_bd, x_p, w1_p, b1_p, w2_p, b2_p, w3_p, b3_p)

    out = out.reshape(Bp, Np, Op)
    return out[:B, :N, :Fout]


# ------------------------------- Glue (JAX) -------------------------------- #
def build_normalized_adjacency(edge_index, num_nodes):
    """Dense D^-1/2 (A + I) D^-1/2, matching PyG GCNConv defaults
    (add_self_loops=True, normalize=True, flow='source_to_target').
    Duplicate edges are summed (PyG default edge_weight behavior)."""
    src = edge_index[0]
    dst = edge_index[1]
    a = jnp.zeros((num_nodes, num_nodes), jnp.float32)
    a = a.at[dst, src].add(1.0)                       # message flows src -> dst
    a = a + jnp.eye(num_nodes, dtype=jnp.float32)     # self loops
    deg = jnp.sum(a, axis=1)
    dinv = jnp.where(deg > 0, 1.0 / jnp.sqrt(deg), 0.0)
    return dinv[:, None] * a * dinv[None, :]


def glorot(key, shape):
    fan_in, fan_out = shape
    limit = jnp.sqrt(6.0 / (fan_in + fan_out))
    return jax.random.uniform(key, shape, jnp.float32, -limit, limit)


def init_params(key, input_dim=32, hidden_dim=24, output_dim=12):
    k1, k2, k3, k4, k5, k6 = jax.random.split(key, 6)
    return dict(
        w1=glorot(k1, (input_dim, hidden_dim)),
        b1=0.1 * jax.random.normal(k4, (1, hidden_dim), jnp.float32),
        w2=glorot(k2, (hidden_dim, hidden_dim)),
        b2=0.1 * jax.random.normal(k5, (1, hidden_dim), jnp.float32),
        w3=glorot(k3, (hidden_dim, output_dim)),
        b3=0.1 * jax.random.normal(k6, (1, output_dim), jnp.float32),
    )


def reference_forward(a_hat, x, p):
    """Pure-JAX reference of the same math (bf16 matmul operands, f32 accum)."""
    bf16, f32 = jnp.bfloat16, jnp.float32

    def mm_nw(h, w):
        return jnp.einsum('bnf,fk->bnk', h.astype(bf16), w.astype(bf16),
                          preferred_element_type=f32)

    def mm_ah(a, h):
        return jnp.einsum('bij,bjk->bik', a.astype(bf16), h.astype(bf16),
                          preferred_element_type=f32)

    h = jnp.maximum(mm_ah(a_hat, mm_nw(x, p["w1"])) + p["b1"], 0.0)
    h = jnp.maximum(mm_ah(a_hat, mm_nw(h, p["w2"])) + p["b2"], 0.0)
    return jax.nn.sigmoid(mm_ah(a_hat, mm_nw(h, p["w3"])) + p["b3"])


# ---------------------------------- main ----------------------------------- #
if __name__ == "__main__":
    key = jax.random.PRNGKey(0)
    k_x, k_p = jax.random.split(key, 2)

    batch = 8
    num_nodes = 16
    input_dim, hidden_dim, output_dim = 32, 24, 12

    # Node features [B, N, input_dim]
    x = jax.random.normal(k_x, (batch, num_nodes, input_dim), jnp.float32)

    # Deterministic per-graph topology: undirected ring + a few symmetric
    # extra edges rotated per graph index.
    ring_src = jnp.arange(num_nodes, dtype=jnp.int32)
    ring_dst = (ring_src + 1) % num_nodes
    extra_src0 = jnp.array([0, 3, 7, 2], dtype=jnp.int32)
    extra_dst0 = jnp.array([8, 11, 14, 9], dtype=jnp.int32)

    a_list = []
    for g in range(batch):
        es = (extra_src0 + g) % num_nodes
        ed = (extra_dst0 + g) % num_nodes
        src = jnp.concatenate([ring_src, ring_dst, es, ed])
        dst = jnp.concatenate([ring_dst, ring_src, ed, es])
        edge_index = jnp.stack([src, dst]).astype(jnp.int32)   # [2, E]
        a_list.append(build_normalized_adjacency(edge_index, num_nodes))
    a_hat = jnp.stack(a_list)                                  # [B, N, N]

    params = init_params(k_p, input_dim, hidden_dim, output_dim)

    out = ucgcn_forward(a_hat, x,
                        params["w1"], params["b1"],
                        params["w2"], params["b2"],
                        params["w3"], params["b3"])
    out = jax.block_until_ready(out)

    ref = reference_forward(a_hat, x, params)
    assert out.shape == (batch, num_nodes, output_dim)
    assert bool(jnp.all(jnp.isfinite(out)))
    assert jnp.allclose(out, ref, atol=2e-3, rtol=2e-3), \
        float(jnp.max(jnp.abs(out - ref)))

    print("KERNEL_OK")
</pallas_src>

<mosaic_0001>
module attributes {stable_mosaic.version = 11 : i64} {
  func.func @_gcn3_kernel(%arg0: i32, %arg1: memref<1x128x128xbf16, #tpu.memory_space<vmem>>, %arg2: memref<1x128x128xbf16, #tpu.memory_space<vmem>>, %arg3: memref<128x128xbf16, #tpu.memory_space<vmem>>, %arg4: memref<1x128xf32, #tpu.memory_space<vmem>>, %arg5: memref<128x128xbf16, #tpu.memory_space<vmem>>, %arg6: memref<1x128xf32, #tpu.memory_space<vmem>>, %arg7: memref<128x128xbf16, #tpu.memory_space<vmem>>, %arg8: memref<1x128xf32, #tpu.memory_space<vmem>>, %arg9: memref<1x128x128xf32, #tpu.memory_space<vmem>>) attributes {dimension_semantics = [#tpu.dimension_semantics<parallel>], iteration_bounds = array<i64: 1>, scalar_prefetch = 0 : i64, scratch_operands = 0 : i64, tpu.core_type = #tpu.core_type<tc>, window_params = [{transform_indices = @transform_0, window_bounds = array<i64: 1, 128, 128>}, {transform_indices = @transform_1, window_bounds = array<i64: 1, 128, 128>}, {pipeline_mode = #tpu.pipeline_mode<synchronous>, transform_indices = @transform_2, window_bounds = array<i64: 128, 128>}, {pipeline_mode = #tpu.pipeline_mode<synchronous>, transform_indices = @transform_3, window_bounds = array<i64: 1, 128>}, {pipeline_mode = #tpu.pipeline_mode<synchronous>, transform_indices = @transform_4, window_bounds = array<i64: 128, 128>}, {pipeline_mode = #tpu.pipeline_mode<synchronous>, transform_indices = @transform_5, window_bounds = array<i64: 1, 128>}, {pipeline_mode = #tpu.pipeline_mode<synchronous>, transform_indices = @transform_6, window_bounds = array<i64: 128, 128>}, {pipeline_mode = #tpu.pipeline_mode<synchronous>, transform_indices = @transform_7, window_bounds = array<i64: 1, 128>}, {transform_indices = @transform_8, window_bounds = array<i64: 1, 128, 128>}]} {
    %c0 = arith.constant 0 : index
    %c0_0 = arith.constant 0 : index
    %c0_1 = arith.constant 0 : index
    %0 = vector.load %arg1[%c0, %c0_0, %c0_1] : memref<1x128x128xbf16, #tpu.memory_space<vmem>>, vector<1x128x128xbf16>
    %1 = vector.shape_cast %0 : vector<1x128x128xbf16> to vector<128x128xbf16>
    %c0_2 = arith.constant 0 : index
    %c0_3 = arith.constant 0 : index
    %c0_4 = arith.constant 0 : index
    %2 = vector.load %arg2[%c0_2, %c0_3, %c0_4] : memref<1x128x128xbf16, #tpu.memory_space<vmem>>, vector<1x128x128xbf16>
    %3 = vector.shape_cast %2 : vector<1x128x128xbf16> to vector<128x128xbf16>
    %c0_5 = arith.constant 0 : index
    %c0_6 = arith.constant 0 : index
    %4 = vector.load %arg3[%c0_5, %c0_6] : memref<128x128xbf16, #tpu.memory_space<vmem>>, vector<128x128xbf16>
    %cst = arith.constant dense<0.000000e+00> : vector<128x128xf32>
    %5 = tpu.matmul %3, %4, %cst {dimension_numbers = #tpu.dot_dimension_numbers<[1], [0], [0], [1], [0, 0, 1, 1], [], []>} : vector<128x128xbf16>, vector<128x128xbf16>, vector<128x128xf32> -> vector<128x128xf32>
    %6 = arith.truncf %5 : vector<128x128xf32> to vector<128x128xbf16>
    %cst_7 = arith.constant dense<0.000000e+00> : vector<128x128xf32>
    %7 = tpu.matmul %1, %6, %cst_7 {dimension_numbers = #tpu.dot_dimension_numbers<[1], [0], [0], [1], [0, 0, 1, 1], [], []>} : vector<128x128xbf16>, vector<128x128xbf16>, vector<128x128xf32> -> vector<128x128xf32>
    %c0_8 = arith.constant 0 : index
    %c0_9 = arith.constant 0 : index
    %8 = vector.load %arg4[%c0_8, %c0_9] : memref<1x128xf32, #tpu.memory_space<vmem>>, vector<1x128xf32>
    %9 = vector.broadcast %8 : vector<1x128xf32> to vector<128x128xf32>
    %10 = arith.addf %7, %9 : vector<128x128xf32>
    %cst_10 = arith.constant 0.000000e+00 : f32
    %11 = vector.broadcast %cst_10 : f32 to vector<128x128xf32>
    %12 = arith.maximumf %10, %11 : vector<128x128xf32>
    %13 = arith.truncf %12 : vector<128x128xf32> to vector<128x128xbf16>
    %c0_11 = arith.constant 0 : index
    %c0_12 = arith.constant 0 : index
    %14 = vector.load %arg5[%c0_11, %c0_12] : memref<128x128xbf16, #tpu.memory_space<vmem>>, vector<128x128xbf16>
    %cst_13 = arith.constant dense<0.000000e+00> : vector<128x128xf32>
    %15 = tpu.matmul %13, %14, %cst_13 {dimension_numbers = #tpu.dot_dimension_numbers<[1], [0], [0], [1], [0, 0, 1, 1], [], []>} : vector<128x128xbf16>, vector<128x128xbf16>, vector<128x128xf32> -> vector<128x128xf32>
    %16 = arith.truncf %15 : vector<128x128xf32> to vector<128x128xbf16>
    %cst_14 = arith.constant dense<0.000000e+00> : vector<128x128xf32>
    %17 = tpu.matmul %1, %16, %cst_14 {dimension_numbers = #tpu.dot_dimension_numbers<[1], [0], [0], [1], [0, 0, 1, 1], [], []>} : vector<128x128xbf16>, vector<128x128xbf16>, vector<128x128xf32> -> vector<128x128xf32>
    %c0_15 = arith.constant 0 : index
    %c0_16 = arith.constant 0 : index
    %18 = vector.load %arg6[%c0_15, %c0_16] : memref<1x128xf32, #tpu.memory_space<vmem>>, vector<1x128xf32>
    %19 = vector.broadcast %18 : vector<1x128xf32> to vector<128x128xf32>
    %20 = arith.addf %17, %19 : vector<128x128xf32>
    %cst_17 = arith.constant 0.000000e+00 : f32
    %21 = vector.broadcast %cst_17 : f32 to vector<128x128xf32>
    %22 = arith.maximumf %20, %21 : vector<128x128xf32>
    %23 = arith.truncf %22 : vector<128x128xf32> to vector<128x128xbf16>
    %c0_18 = arith.constant 0 : index
    %c0_19 = arith.constant 0 : index
    %24 = vector.load %arg7[%c0_18, %c0_19] : memref<128x128xbf16, #tpu.memory_space<vmem>>, vector<128x128xbf16>
    %cst_20 = arith.constant dense<0.000000e+00> : vector<128x128xf32>
    %25 = tpu.matmul %23, %24, %cst_20 {dimension_numbers = #tpu.dot_dimension_numbers<[1], [0], [0], [1], [0, 0, 1, 1], [], []>} : vector<128x128xbf16>, vector<128x128xbf16>, vector<128x128xf32> -> vector<128x128xf32>
    %26 = arith.truncf %25 : vector<128x128xf32> to vector<128x128xbf16>
    %cst_21 = arith.constant dense<0.000000e+00> : vector<128x128xf32>
    %27 = tpu.matmul %1, %26, %cst_21 {dimension_numbers = #tpu.dot_dimension_numbers<[1], [0], [0], [1], [0, 0, 1, 1], [], []>} : vector<128x128xbf16>, vector<128x128xbf16>, vector<128x128xf32> -> vector<128x128xf32>
    %c0_22 = arith.constant 0 : index
    %c0_23 = arith.constant 0 : index
    %28 = vector.load %arg8[%c0_22, %c0_23] : memref<1x128xf32, #tpu.memory_space<vmem>>, vector<1x128xf32>
    %29 = vector.broadcast %28 : vector<1x128xf32> to vector<128x128xf32>
    %30 = arith.addf %27, %29 : vector<128x128xf32>
    %31 = arith.negf %30 : vector<128x128xf32>
    %32 = math.exp %31 : vector<128x128xf32>
    %cst_24 = arith.constant 1.000000e+00 : f32
    %33 = vector.broadcast %cst_24 : f32 to vector<128x128xf32>
    %34 = arith.addf %33, %32 : vector<128x128xf32>
    %35 = arith.divf %33, %34 : vector<128x128xf32>
    %c0_25 = arith.constant 0 : index
    %c0_26 = arith.constant 0 : index
    %c0_27 = arith.constant 0 : index
    %36 = vector.load %arg9[%c0_25, %c0_26, %c0_27] : memref<1x128x128xf32, #tpu.memory_space<vmem>>, vector<1x128x128xf32>
    %37 = vector.shape_cast %36 : vector<1x128x128xf32> to vector<128x128xf32>
    %38 = vector.shape_cast %35 : vector<128x128xf32> to vector<1x128x128xf32>
    tpu.vector_store %arg9[%c0_25, %c0_26, %c0_27], %38 {strides = array<i32>} : memref<1x128x128xf32, #tpu.memory_space<vmem>>, vector<1x128x128xf32>,
    return
  }
  func.func @transform_0(%arg0: i32) -> (i32, i32, i32) {
    %c0_i32 = arith.constant 0 : i32
    %c0_i32_0 = arith.constant 0 : i32
    %c0_i32_1 = arith.constant 0 : i32
    return %arg0, %c0_i32, %c0_i32_0 : i32, i32, i32
  }
  func.func @transform_1(%arg0: i32) -> (i32, i32, i32) {
    %c0_i32 = arith.constant 0 : i32
    %c0_i32_0 = arith.constant 0 : i32
    %c0_i32_1 = arith.constant 0 : i32
    return %arg0, %c0_i32, %c0_i32_0 : i32, i32, i32
  }
  func.func @transform_2(%arg0: i32) -> (i32, i32) {
    %c0_i32 = arith.constant 0 : i32
    %c0_i32_0 = arith.constant 0 : i32
    %c0_i32_1 = arith.constant 0 : i32
    return %c0_i32, %c0_i32_0 : i32, i32
  }
  func.func @transform_3(%arg0: i32) -> (i32, i32) {
    %c0_i32 = arith.constant 0 : i32
    %c0_i32_0 = arith.constant 0 : i32
    %c0_i32_1 = arith.constant 0 : i32
    return %c0_i32, %c0_i32_0 : i32, i32
  }
  func.func @transform_4(%arg0: i32) -> (i32, i32) {
    %c0_i32 = arith.constant 0 : i32
    %c0_i32_0 = arith.constant 0 : i32
    %c0_i32_1 = arith.constant 0 : i32
    return %c0_i32, %c0_i32_0 : i32, i32
  }
  func.func @transform_5(%arg0: i32) -> (i32, i32) {
    %c0_i32 = arith.constant 0 : i32
    %c0_i32_0 = arith.constant 0 : i32
    %c0_i32_1 = arith.constant 0 : i32
    return %c0_i32, %c0_i32_0 : i32, i32
  }
  func.func @transform_6(%arg0: i32) -> (i32, i32) {
    %c0_i32 = arith.constant 0 : i32
    %c0_i32_0 = arith.constant 0 : i32
    %c0_i32_1 = arith.constant 0 : i32
    return %c0_i32, %c0_i32_0 : i32, i32
  }
  func.func @transform_7(%arg0: i32) -> (i32, i32) {
    %c0_i32 = arith.constant 0 : i32
    %c0_i32_0 = arith.constant 0 : i32
    %c0_i32_1 = arith.constant 0 : i32
    return %c0_i32, %c0_i32_0 : i32, i32
  }
  func.func @transform_8(%arg0: i32) -> (i32, i32, i32) {
    %c0_i32 = arith.constant 0 : i32
    %c0_i32_0 = arith.constant 0 : i32
    %c0_i32_1 = arith.constant 0 : i32
    return %arg0, %c0_i32, %c0_i32_0 : i32, i32, i32
  }
}

</mosaic_0001>

<llo_original>
// kernel: ucgcn_forward.1
$region0: #{ucgcn_forward.1}
  #allocation0 [shape = 'u32[]', space=smem, size = 0x4, offset = 0x4, fixed_abs, tag = 'smem constant byte address 0x4 - core index']
  #allocation1 [shape = 'u32[72,128]{1,0:T(1,128)}', space=vmem, size = 0x9000, scoped, tag = 'internal scratch']
  %s0 = inlined_call_operand.vmem [shape: bf16[1,128,128], index: 0, kind: input, shape index: {}]
  %s1 = inlined_call_operand.vmem [shape: bf16[1,128,128], index: 1, kind: input, shape index: {}]
  %s2 = inlined_call_operand.vmem [shape: bf16[128,128], index: 2, kind: input, shape index: {}]
  %s3 = inlined_call_operand.vmem [shape: f32[1,128], index: 3, kind: input, shape index: {}]
  %s4 = inlined_call_operand.vmem [shape: bf16[128,128], index: 4, kind: input, shape index: {}]
  %s5 = inlined_call_operand.vmem [shape: f32[1,128], index: 5, kind: input, shape index: {}]
  %s6 = inlined_call_operand.vmem [shape: bf16[128,128], index: 6, kind: input, shape index: {}]
  %s7 = inlined_call_operand.vmem [shape: f32[1,128], index: 7, kind: input, shape index: {}]
  %s8 = inlined_call_operand.vmem [shape: f32[1,128,128], index: 8, kind: output, shape index: {}]
  %s9 = sld [smem:[#allocation0]]
  $region42: #{ucgcn_forward.1} parent=0
    _
  %s11 = ssub.s32 1, %s9
  %s12 = scalar_select 0, %s11, %s9
  // Predicated region
  $region2: #{ucgcn_forward.1} parent=0 // pred_check
    _
  $region3: #{ucgcn_forward.1} parent=0 // pred_check_branch
    %14 = sbr.rel (0) target = $region5
  $region4: #{ucgcn_forward.1} parent=0 // pred_region
    _
  $region5: #{ucgcn_forward.1} parent=0 // pred_fallthru
    _
  // Predicated region
  $region6: #{ucgcn_forward.1} parent=0 // pred_check
    _
  $region7: #{ucgcn_forward.1} parent=0 // pred_check_branch
    %16 = sbr.rel (0) target = $region9
  $region8: #{ucgcn_forward.1} parent=0 // pred_region
    _
  $region9: #{ucgcn_forward.1} parent=0 // pred_fallthru
    _
  // Predicated region
  $region10: #{ucgcn_forward.1} parent=0 // pred_check
    _
  $region11: #{ucgcn_forward.1} parent=0 // pred_check_branch
    %18 = sbr.rel (0) target = $region13
  $region12: #{ucgcn_forward.1} parent=0 // pred_region
    _
  $region13: #{ucgcn_forward.1} parent=0 // pred_fallthru
    _
  // Predicated region
  $region14: #{ucgcn_forward.1} parent=0 // pred_check
    _
  $region15: #{ucgcn_forward.1} parent=0 // pred_check_branch
    %20 = sbr.rel (0) target = $region17
  $region16: #{ucgcn_forward.1} parent=0 // pred_region
    _
  $region17: #{ucgcn_forward.1} parent=0 // pred_fallthru
    _
  // Predicated region
  $region18: #{ucgcn_forward.1} parent=0 // pred_check
    _
  $region19: #{ucgcn_forward.1} parent=0 // pred_check_branch
    %22 = sbr.rel (0) target = $region21
  $region20: #{ucgcn_forward.1} parent=0 // pred_region
    _
  $region21: #{ucgcn_forward.1} parent=0 // pred_fallthru
    _
  // Predicated region
  $region22: #{ucgcn_forward.1} parent=0 // pred_check
    _
  $region23: #{ucgcn_forward.1} parent=0 // pred_check_branch
    %24 = sbr.rel (0) target = $region25
  $region24: #{ucgcn_forward.1} parent=0 // pred_region
    _
  $region25: #{ucgcn_forward.1} parent=0 // pred_fallthru
    _
  // Predicated region
  $region26: #{ucgcn_forward.1} parent=0 // pred_check
    _
  $region27: #{ucgcn_forward.1} parent=0 // pred_check_branch
    %26 = sbr.rel (0) target = $region29
  $region28: #{ucgcn_forward.1} parent=0 // pred_region
    _
  $region29: #{ucgcn_forward.1} parent=0 // pred_fallthru
    _
  // Predicated region
  $region30: #{ucgcn_forward.1} parent=0 // pred_check
    _
  $region31: #{ucgcn_forward.1} parent=0 // pred_check_branch
    %28 = sbr.rel (0) target = $region33
  $region32: #{ucgcn_forward.1} parent=0 // pred_region
    _
  $region33: #{ucgcn_forward.1} parent=0 // pred_fallthru
    _
  %v29 = vld [vmem:[%s0] sm:$0xf]
  %v30 = vld [vmem:[%s0 + $0x4] sm:$0xf]
  %v31 = vld [vmem:[%s0 + $0x8] sm:$0xf]
  %v32 = vld [vmem:[%s0 + $0xc] sm:$0xf]
  %v33 = vld [vmem:[%s0 + $0x10] sm:$0xf]
  %v34 = vld [vmem:[%s0 + $0x14] sm:$0xf]
  %v35 = vld [vmem:[%s0 + $0x18] sm:$0xf]
  %v36 = vld [vmem:[%s0 + $0x1c] sm:$0xf]
  %v37 = vld [vmem:[%s0 + $0x20] sm:$0xf]
  %v38 = vld [vmem:[%s0 + $0x24] sm:$0xf]
  %v39 = vld [vmem:[%s0 + $0x28] sm:$0xf]
  %v40 = vld [vmem:[%s0 + $0x2c] sm:$0xf]
  %v41 = vld [vmem:[%s0 + $0x30] sm:$0xf]
  %v42 = vld [vmem:[%s0 + $0x34] sm:$0xf]
  %v43 = vld [vmem:[%s0 + $0x38] sm:$0xf]
  %v44 = vld [vmem:[%s0 + $0x3c] sm:$0xf]
  %v45 = vld [vmem:[%s1] sm:$0xf]
  %v46 = vld [vmem:[%s1 + $0x4] sm:$0xf]
  %v47 = vld [vmem:[%s1 + $0x8] sm:$0xf]
  %v48 = vld [vmem:[%s1 + $0xc] sm:$0xf]
  %v49 = vld [vmem:[%s1 + $0x10] sm:$0xf]
  %v50 = vld [vmem:[%s1 + $0x14] sm:$0xf]
  %v51 = vld [vmem:[%s1 + $0x18] sm:$0xf]
  %v52 = vld [vmem:[%s1 + $0x1c] sm:$0xf]
  %v53 = vld [vmem:[%s1 + $0x20] sm:$0xf]
  %v54 = vld [vmem:[%s1 + $0x24] sm:$0xf]
  %v55 = vld [vmem:[%s1 + $0x28] sm:$0xf]
  %v56 = vld [vmem:[%s1 + $0x2c] sm:$0xf]
  %v57 = vld [vmem:[%s1 + $0x30] sm:$0xf]
  %v58 = vld [vmem:[%s1 + $0x34] sm:$0xf]
  %v59 = vld [vmem:[%s1 + $0x38] sm:$0xf]
  %v60 = vld [vmem:[%s1 + $0x3c] sm:$0xf]
  %v61 = vld [vmem:[%s2] sm:$0xf]
  %v62 = vld [vmem:[%s2 + $0x4] sm:$0xf]
  %v63 = vld [vmem:[%s2 + $0x8] sm:$0xf]
  %v64 = vld [vmem:[%s2 + $0xc] sm:$0xf]
  %v65 = vld [vmem:[%s2 + $0x10] sm:$0xf]
  %v66 = vld [vmem:[%s2 + $0x14] sm:$0xf]
  %v67 = vld [vmem:[%s2 + $0x18] sm:$0xf]
  %v68 = vld [vmem:[%s2 + $0x1c] sm:$0xf]
  %v69 = vld [vmem:[%s2 + $0x20] sm:$0xf]
  %v70 = vld [vmem:[%s2 + $0x24] sm:$0xf]
  %v71 = vld [vmem:[%s2 + $0x28] sm:$0xf]
  %v72 = vld [vmem:[%s2 + $0x2c] sm:$0xf]
  %v73 = vld [vmem:[%s2 + $0x30] sm:$0xf]
  %v74 = vld [vmem:[%s2 + $0x34] sm:$0xf]
  %v75 = vld [vmem:[%s2 + $0x38] sm:$0xf]
  %v76 = vld [vmem:[%s2 + $0x3c] sm:$0xf]
  %v93 = vunpack.c.l.b16 %v45
  %v94 = vunpack.c.l.b16 %v46
  %v95 = vunpack.c.l.b16 %v47
  %v96 = vunpack.c.l.b16 %v48
  %v97 = vunpack.c.l.b16 %v49
  %v98 = vunpack.c.l.b16 %v50
  %v99 = vunpack.c.l.b16 %v51
  %v100 = vunpack.c.l.b16 %v52
  %v101 = vunpack.c.l.b16 %v53
  %v102 = vunpack.c.l.b16 %v54
  %v103 = vunpack.c.l.b16 %v55
  %v104 = vunpack.c.l.b16 %v56
  %v105 = vunpack.c.l.b16 %v57
  %v106 = vunpack.c.l.b16 %v58
  %v107 = vunpack.c.l.b16 %v59
  %v108 = vunpack.c.l.b16 %v60
  %v109 = vpack.c.b16 %v94, %v93
  %v110 = vpack.c.b16 %v96, %v95
  %v111 = vpack.c.b16 %v98, %v97
  %v112 = vpack.c.b16 %v100, %v99
  %v113 = vpack.c.b16 %v102, %v101
  %v114 = vpack.c.b16 %v104, %v103
  %v115 = vpack.c.b16 %v106, %v105
  %v116 = vpack.c.b16 %v108, %v107
  %v141 = vunpack.c.l.b16 %v61
  %v142 = vunpack.c.l.b16 %v62
  %v143 = vunpack.c.l.b16 %v63
  %v144 = vunpack.c.l.b16 %v64
  %v145 = vunpack.c.l.b16 %v65
  %v146 = vunpack.c.l.b16 %v66
  %v147 = vunpack.c.l.b16 %v67
  %v148 = vunpack.c.l.b16 %v68
  %v149 = vunpack.c.l.b16 %v69
  %v150 = vunpack.c.l.b16 %v70
  %v151 = vunpack.c.l.b16 %v71
  %v152 = vunpack.c.l.b16 %v72
  %v153 = vunpack.c.l.b16 %v73
  %v154 = vunpack.c.l.b16 %v74
  %v155 = vunpack.c.l.b16 %v75
  %v156 = vunpack.c.l.b16 %v76
  %v157 = vpack.c.b16 %v142, %v141
  %v158 = vpack.c.b16 %v144, %v143
  %v159 = vpack.c.b16 %v146, %v145
  %v160 = vpack.c.b16 %v148, %v147
  %v161 = vpack.c.b16 %v150, %v149
  %v162 = vpack.c.b16 %v152, %v151
  %v163 = vpack.c.b16 %v154, %v153
  %v164 = vpack.c.b16 %v156, %v155
  %173 = vmatpush.bf16.msra.mxu0 %v164
  %174 = vmatpush.bf16.msra.mxu0 %v163
  %175 = vmatpush.bf16.msra.mxu0 %v162
  %176 = vmatpush.bf16.msra.mxu0 %v161
  %177 = vmatpush.bf16.msra.mxu0 %v160
  %178 = vmatpush.bf16.msra.mxu0 %v159
  %179 = vmatpush.bf16.msra.mxu0 %v158
  %180 = vmatpush.bf16.msra.mxu0 %v157
  %181 = vmatmul.bf16.gmra.mxu0 %v109
  %v182 = vpop.f32.mrf.mxu0
  %v183 = vadd.f32 0.0, %v182
  %v184 = vpop.f32.mrf.mxu0
  %v185 = vadd.f32 0.0, %v184
  %186 = vmatmul.bf16.gmra.mxu0 %v110
  %v187 = vpop.f32.mrf.mxu0
  %v188 = vadd.f32 0.0, %v187
  %v189 = vpop.f32.mrf.mxu0
  %v190 = vadd.f32 0.0, %v189
  %191 = vmatmul.bf16.gmra.mxu0 %v111
  %v192 = vpop.f32.mrf.mxu0
  %v193 = vadd.f32 0.0, %v192
  %v194 = vpop.f32.mrf.mxu0
  %v195 = vadd.f32 0.0, %v194
  %196 = vmatmul.bf16.gmra.mxu0 %v112
  %v197 = vpop.f32.mrf.mxu0
  %v198 = vadd.f32 0.0, %v197
  %v199 = vpop.f32.mrf.mxu0
  %v200 = vadd.f32 0.0, %v199
  %201 = vmatmul.bf16.gmra.mxu0 %v113
  %v202 = vpop.f32.mrf.mxu0
  %v203 = vadd.f32 0.0, %v202
  %v204 = vpop.f32.mrf.mxu0
  %v205 = vadd.f32 0.0, %v204
  %206 = vmatmul.bf16.gmra.mxu0 %v114
  %v207 = vpop.f32.mrf.mxu0
  %v208 = vadd.f32 0.0, %v207
  %v209 = vpop.f32.mrf.mxu0
  %v210 = vadd.f32 0.0, %v209
  %211 = vmatmul.bf16.gmra.mxu0 %v115
  %v212 = vpop.f32.mrf.mxu0
  %v213 = vadd.f32 0.0, %v212
  %v214 = vpop.f32.mrf.mxu0
  %v215 = vadd.f32 0.0, %v214
  %216 = vmatmul.bf16.gmra.mxu0 %v116
  %v217 = vpop.f32.mrf.mxu0
  %v218 = vadd.f32 0.0, %v217
  %v219 = vpop.f32.mrf.mxu0
  %v220 = vadd.f32 0.0, %v219
  %221 = vdwg.mxu0
  %v222 = vpack.c.bf16 %v185, %v183
  %v223 = vpack.c.bf16 %v190, %v188
  %v224 = vpack.c.bf16 %v195, %v193
  %v225 = vpack.c.bf16 %v200, %v198
  %v226 = vpack.c.bf16 %v205, %v203
  %v227 = vpack.c.bf16 %v210, %v208
  %v228 = vpack.c.bf16 %v215, %v213
  %v229 = vpack.c.bf16 %v220, %v218
  %v230 = vld [vmem:[%s3] sm:$0x1]
  %v232 = vperm.slane %v230, 0
  %v250 = vunpack.c.l.b16 %v29
  %v251 = vunpack.c.l.b16 %v30
  %v252 = vunpack.c.l.b16 %v31
  %v253 = vunpack.c.l.b16 %v32
  %v254 = vunpack.c.l.b16 %v33
  %v255 = vunpack.c.l.b16 %v34
  %v256 = vunpack.c.l.b16 %v35
  %v257 = vunpack.c.l.b16 %v36
  %v258 = vunpack.c.l.b16 %v37
  %v259 = vunpack.c.l.b16 %v38
  %v260 = vunpack.c.l.b16 %v39
  %v261 = vunpack.c.l.b16 %v40
  %v262 = vunpack.c.l.b16 %v41
  %v263 = vunpack.c.l.b16 %v42
  %v264 = vunpack.c.l.b16 %v43
  %v265 = vunpack.c.l.b16 %v44
  %v266 = vpack.c.b16 %v251, %v250
  %v267 = vpack.c.b16 %v253, %v252
  %v268 = vpack.c.b16 %v255, %v254
  %v269 = vpack.c.b16 %v257, %v256
  %v270 = vpack.c.b16 %v259, %v258
  %v271 = vpack.c.b16 %v261, %v260
  %v272 = vpack.c.b16 %v263, %v262
  %v273 = vpack.c.b16 %v265, %v264
  %282 = vmatpush.bf16.msra.mxu0 %v229
  %283 = vmatpush.bf16.msra.mxu0 %v228
  %284 = vmatpush.bf16.msra.mxu0 %v227
  %285 = vmatpush.bf16.msra.mxu0 %v226
  %286 = vmatpush.bf16.msra.mxu0 %v225
  %287 = vmatpush.bf16.msra.mxu0 %v224
  %288 = vmatpush.bf16.msra.mxu0 %v223
  %289 = vmatpush.bf16.msra.mxu0 %v222
  %290 = vmatmul.bf16.gmra.mxu0 %v266
  %v291 = vpop.f32.mrf.mxu0
  %v292 = vadd.f32 %v232, %v291
  %v293 = vpop.f32.mrf.mxu0
  %v294 = vadd.f32 %v232, %v293
  %295 = vmatmul.bf16.gmra.mxu0 %v267
  %v296 = vpop.f32.mrf.mxu0
  %v297 = vadd.f32 %v232, %v296
  %v298 = vpop.f32.mrf.mxu0
  %v299 = vadd.f32 %v232, %v298
  %300 = vmatmul.bf16.gmra.mxu0 %v268
  %v301 = vpop.f32.mrf.mxu0
  %v302 = vadd.f32 %v232, %v301
  %v303 = vpop.f32.mrf.mxu0
  %v304 = vadd.f32 %v232, %v303
  %305 = vmatmul.bf16.gmra.mxu0 %v269
  %v306 = vpop.f32.mrf.mxu0
  %v307 = vadd.f32 %v232, %v306
  %v308 = vpop.f32.mrf.mxu0
  %v309 = vadd.f32 %v232, %v308
  %310 = vmatmul.bf16.gmra.mxu0 %v270
  %v311 = vpop.f32.mrf.mxu0
  %v312 = vadd.f32 %v232, %v311
  %v313 = vpop.f32.mrf.mxu0
  %v314 = vadd.f32 %v232, %v313
  %315 = vmatmul.bf16.gmra.mxu0 %v271
  %v316 = vpop.f32.mrf.mxu0
  %v317 = vadd.f32 %v232, %v316
  %v318 = vpop.f32.mrf.mxu0
  %v319 = vadd.f32 %v232, %v318
  %320 = vmatmul.bf16.gmra.mxu0 %v272
  %v321 = vpop.f32.mrf.mxu0
  %v322 = vadd.f32 %v232, %v321
  %v323 = vpop.f32.mrf.mxu0
  %v324 = vadd.f32 %v232, %v323
  %325 = vmatmul.bf16.gmra.mxu0 %v273
  %v326 = vpop.f32.mrf.mxu0
  %v327 = vadd.f32 %v232, %v326
  %v328 = vpop.f32.mrf.mxu0
  %v329 = vadd.f32 %v232, %v328
  %330 = vdwg.mxu0
  %v331 = vmax.f32 %v292, 0.0
  %v332 = vmax.f32 %v294, 0.0
  %v333 = vmax.f32 %v297, 0.0
  %v334 = vmax.f32 %v299, 0.0
  %v335 = vmax.f32 %v302, 0.0
  %v336 = vmax.f32 %v304, 0.0
  %v337 = vmax.f32 %v307, 0.0
  %v338 = vmax.f32 %v309, 0.0
  %v339 = vmax.f32 %v312, 0.0
  %v340 = vmax.f32 %v314, 0.0
  %v341 = vmax.f32 %v317, 0.0
  %v342 = vmax.f32 %v319, 0.0
  %v343 = vmax.f32 %v322, 0.0
  %v344 = vmax.f32 %v324, 0.0
  %v345 = vmax.f32 %v327, 0.0
  %v346 = vmax.f32 %v329, 0.0
  %v347 = vpack.c.bf16 %v332, %v331
  %v348 = vpack.c.bf16 %v334, %v333
  %v349 = vpack.c.bf16 %v336, %v335
  %v350 = vpack.c.bf16 %v338, %v337
  %v351 = vpack.c.bf16 %v340, %v339
  %v352 = vpack.c.bf16 %v342, %v341
  %v353 = vpack.c.bf16 %v344, %v343
  %v354 = vpack.c.bf16 %v346, %v345
  %v355 = vld [vmem:[%s4] sm:$0xf]
  %v356 = vld [vmem:[%s4 + $0x4] sm:$0xf]
  %v357 = vld [vmem:[%s4 + $0x8] sm:$0xf]
  %v358 = vld [vmem:[%s4 + $0xc] sm:$0xf]
  %v359 = vld [vmem:[%s4 + $0x10] sm:$0xf]
  %v360 = vld [vmem:[%s4 + $0x14] sm:$0xf]
  %v361 = vld [vmem:[%s4 + $0x18] sm:$0xf]
  %v362 = vld [vmem:[%s4 + $0x1c] sm:$0xf]
  %v363 = vld [vmem:[%s4 + $0x20] sm:$0xf]
  %v364 = vld [vmem:[%s4 + $0x24] sm:$0xf]
  %v365 = vld [vmem:[%s4 + $0x28] sm:$0xf]
  %v366 = vld [vmem:[%s4 + $0x2c] sm:$0xf]
  %v367 = vld [vmem:[%s4 + $0x30] sm:$0xf]
  %v368 = vld [vmem:[%s4 + $0x34] sm:$0xf]
  %v369 = vld [vmem:[%s4 + $0x38] sm:$0xf]
  %v370 = vld [vmem:[%s4 + $0x3c] sm:$0xf]
  %v387 = vunpack.c.l.b16 %v355
  %v388 = vunpack.c.l.b16 %v356
  %v389 = vunpack.c.l.b16 %v357
  %v390 = vunpack.c.l.b16 %v358
  %v391 = vunpack.c.l.b16 %v359
  %v392 = vunpack.c.l.b16 %v360
  %v393 = vunpack.c.l.b16 %v361
  %v394 = vunpack.c.l.b16 %v362
  %v395 = vunpack.c.l.b16 %v363
  %v396 = vunpack.c.l.b16 %v364
  %v397 = vunpack.c.l.b16 %v365
  %v398 = vunpack.c.l.b16 %v366
  %v399 = vunpack.c.l.b16 %v367
  %v400 = vunpack.c.l.b16 %v368
  %v401 = vunpack.c.l.b16 %v369
  %v402 = vunpack.c.l.b16 %v370
  %v403 = vpack.c.b16 %v388, %v387
  %v404 = vpack.c.b16 %v390, %v389
  %v405 = vpack.c.b16 %v392, %v391
  %v406 = vpack.c.b16 %v394, %v393
  %v407 = vpack.c.b16 %v396, %v395
  %v408 = vpack.c.b16 %v398, %v397
  %v409 = vpack.c.b16 %v400, %v399
  %v410 = vpack.c.b16 %v402, %v401
  %419 = vmatpush.bf16.msra.mxu0 %v410
  %420 = vmatpush.bf16.msra.mxu0 %v409
  %421 = vmatpush.bf16.msra.mxu0 %v408
  %422 = vmatpush.bf16.msra.mxu0 %v407
  %423 = vmatpush.bf16.msra.mxu0 %v406
  %424 = vmatpush.bf16.msra.mxu0 %v405
  %425 = vmatpush.bf16.msra.mxu0 %v404
  %426 = vmatpush.bf16.msra.mxu0 %v403
  %427 = vmatmul.bf16.gmra.mxu0 %v347
  %v428 = vpop.f32.mrf.mxu0
  %v429 = vadd.f32 0.0, %v428
  %v430 = vpop.f32.mrf.mxu0
  %v431 = vadd.f32 0.0, %v430
  %432 = vmatmul.bf16.gmra.mxu0 %v348
  %v433 = vpop.f32.mrf.mxu0
  %v434 = vadd.f32 0.0, %v433
  %v435 = vpop.f32.mrf.mxu0
  %v436 = vadd.f32 0.0, %v435
  %437 = vmatmul.bf16.gmra.mxu0 %v349
  %v438 = vpop.f32.mrf.mxu0
  %v439 = vadd.f32 0.0, %v438
  %v440 = vpop.f32.mrf.mxu0
  %v441 = vadd.f32 0.0, %v440
  %442 = vmatmul.bf16.gmra.mxu0 %v350
  %v443 = vpop.f32.mrf.mxu0
  %v444 = vadd.f32 0.0, %v443
  %v445 = vpop.f32.mrf.mxu0
  %v446 = vadd.f32 0.0, %v445
  %447 = vmatmul.bf16.gmra.mxu0 %v351
  %v448 = vpop.f32.mrf.mxu0
  %v449 = vadd.f32 0.0, %v448
  %v450 = vpop.f32.mrf.mxu0
  %v451 = vadd.f32 0.0, %v450
  %452 = vmatmul.bf16.gmra.mxu0 %v352
  %v453 = vpop.f32.mrf.mxu0
  %v454 = vadd.f32 0.0, %v453
  %v455 = vpop.f32.mrf.mxu0
  %v456 = vadd.f32 0.0, %v455
  %457 = vmatmul.bf16.gmra.mxu0 %v353
  %v458 = vpop.f32.mrf.mxu0
  %v459 = vadd.f32 0.0, %v458
  %v460 = vpop.f32.mrf.mxu0
  %v461 = vadd.f32 0.0, %v460
  %462 = vmatmul.bf16.gmra.mxu0 %v354
  %v463 = vpop.f32.mrf.mxu0
  %v464 = vadd.f32 0.0, %v463
  %v465 = vpop.f32.mrf.mxu0
  %v466 = vadd.f32 0.0, %v465
  %467 = vdwg.mxu0
  %v468 = vpack.c.bf16 %v431, %v429
  %v469 = vpack.c.bf16 %v436, %v434
  %v470 = vpack.c.bf16 %v441, %v439
  %v471 = vpack.c.bf16 %v446, %v444
  %v472 = vpack.c.bf16 %v451, %v449
  %v473 = vpack.c.bf16 %v456, %v454
  %v474 = vpack.c.bf16 %v461, %v459
  %v475 = vpack.c.bf16 %v466, %v464
  %v476 = vld [vmem:[%s5] sm:$0x1]
  %v478 = vperm.slane %v476, 0
  %480 = vmatpush.bf16.msra.mxu0 %v475
  %481 = vmatpush.bf16.msra.mxu0 %v474
  %482 = vmatpush.bf16.msra.mxu0 %v473
  %483 = vmatpush.bf16.msra.mxu0 %v472
  %484 = vmatpush.bf16.msra.mxu0 %v471
  %485 = vmatpush.bf16.msra.mxu0 %v470
  %486 = vmatpush.bf16.msra.mxu0 %v469
  %487 = vmatpush.bf16.msra.mxu0 %v468
  %488 = vmatmul.bf16.gmra.mxu0 %v266
  %v489 = vpop.f32.mrf.mxu0
  %v490 = vadd.f32 %v478, %v489
  %v491 = vpop.f32.mrf.mxu0
  %v492 = vadd.f32 %v478, %v491
  %493 = vmatmul.bf16.gmra.mxu0 %v267
  %v494 = vpop.f32.mrf.mxu0
  %v495 = vadd.f32 %v478, %v494
  %v496 = vpop.f32.mrf.mxu0
  %v497 = vadd.f32 %v478, %v496
  %498 = vmatmul.bf16.gmra.mxu0 %v268
  %v499 = vpop.f32.mrf.mxu0
  %v500 = vadd.f32 %v478, %v499
  %v501 = vpop.f32.mrf.mxu0
  %v502 = vadd.f32 %v478, %v501
  %503 = vmatmul.bf16.gmra.mxu0 %v269
  %v504 = vpop.f32.mrf.mxu0
  %v505 = vadd.f32 %v478, %v504
  %v506 = vpop.f32.mrf.mxu0
  %v507 = vadd.f32 %v478, %v506
  %508 = vmatmul.bf16.gmra.mxu0 %v270
  %v509 = vpop.f32.mrf.mxu0
  %v510 = vadd.f32 %v478, %v509
  %v511 = vpop.f32.mrf.mxu0
  %v512 = vadd.f32 %v478, %v511
  %513 = vmatmul.bf16.gmra.mxu0 %v271
  %v514 = vpop.f32.mrf.mxu0
  %v515 = vadd.f32 %v478, %v514
  %v516 = vpop.f32.mrf.mxu0
  %v517 = vadd.f32 %v478, %v516
  %518 = vmatmul.bf16.gmra.mxu0 %v272
  %v519 = vpop.f32.mrf.mxu0
  %v520 = vadd.f32 %v478, %v519
  %v521 = vpop.f32.mrf.mxu0
  %v522 = vadd.f32 %v478, %v521
  %523 = vmatmul.bf16.gmra.mxu0 %v273
  %v524 = vpop.f32.mrf.mxu0
  %v525 = vadd.f32 %v478, %v524
  %v526 = vpop.f32.mrf.mxu0
  %v527 = vadd.f32 %v478, %v526
  %528 = vdwg.mxu0
  %v529 = vmax.f32 %v490, 0.0
  %v530 = vmax.f32 %v492, 0.0
  %v531 = vmax.f32 %v495, 0.0
  %v532 = vmax.f32 %v497, 0.0
  %v533 = vmax.f32 %v500, 0.0
  %v534 = vmax.f32 %v502, 0.0
  %v535 = vmax.f32 %v505, 0.0
  %v536 = vmax.f32 %v507, 0.0
  %v537 = vmax.f32 %v510, 0.0
  %v538 = vmax.f32 %v512, 0.0
  %v539 = vmax.f32 %v515, 0.0
  %v540 = vmax.f32 %v517, 0.0
  %v541 = vmax.f32 %v520, 0.0
  %v542 = vmax.f32 %v522, 0.0
  %v543 = vmax.f32 %v525, 0.0
  %v544 = vmax.f32 %v527, 0.0
  %v545 = vpack.c.bf16 %v530, %v529
  %v546 = vpack.c.bf16 %v532, %v531
  %v547 = vpack.c.bf16 %v534, %v533
  %v548 = vpack.c.bf16 %v536, %v535
  %v549 = vpack.c.bf16 %v538, %v537
  %v550 = vpack.c.bf16 %v540, %v539
  %v551 = vpack.c.bf16 %v542, %v541
  %v552 = vpack.c.bf16 %v544, %v543
  %v553 = vld [vmem:[%s6] sm:$0xf]
  %v554 = vld [vmem:[%s6 + $0x4] sm:$0xf]
  %v555 = vld [vmem:[%s6 + $0x8] sm:$0xf]
  %v556 = vld [vmem:[%s6 + $0xc] sm:$0xf]
  %v557 = vld [vmem:[%s6 + $0x10] sm:$0xf]
  %v558 = vld [vmem:[%s6 + $0x14] sm:$0xf]
  %v559 = vld [vmem:[%s6 + $0x18] sm:$0xf]
  %v560 = vld [vmem:[%s6 + $0x1c] sm:$0xf]
  %v561 = vld [vmem:[%s6 + $0x20] sm:$0xf]
  %v562 = vld [vmem:[%s6 + $0x24] sm:$0xf]
  %v563 = vld [vmem:[%s6 + $0x28] sm:$0xf]
  %v564 = vld [vmem:[%s6 + $0x2c] sm:$0xf]
  %v565 = vld [vmem:[%s6 + $0x30] sm:$0xf]
  %v566 = vld [vmem:[%s6 + $0x34] sm:$0xf]
  %v567 = vld [vmem:[%s6 + $0x38] sm:$0xf]
  %v568 = vld [vmem:[%s6 + $0x3c] sm:$0xf]
  %v585 = vunpack.c.l.b16 %v553
  %v586 = vunpack.c.l.b16 %v554
  %v587 = vunpack.c.l.b16 %v555
  %v588 = vunpack.c.l.b16 %v556
  %v589 = vunpack.c.l.b16 %v557
  %v590 = vunpack.c.l.b16 %v558
  %v591 = vunpack.c.l.b16 %v559
  %v592 = vunpack.c.l.b16 %v560
  %v593 = vunpack.c.l.b16 %v561
  %v594 = vunpack.c.l.b16 %v562
  %v595 = vunpack.c.l.b16 %v563
  %v596 = vunpack.c.l.b16 %v564
  %v597 = vunpack.c.l.b16 %v565
  %v598 = vunpack.c.l.b16 %v566
  %v599 = vunpack.c.l.b16 %v567
  %v600 = vunpack.c.l.b16 %v568
  %v601 = vpack.c.b16 %v586, %v585
  %v602 = vpack.c.b16 %v588, %v587
  %v603 = vpack.c.b16 %v590, %v589
  %v604 = vpack.c.b16 %v592, %v591
  %v605 = vpack.c.b16 %v594, %v593
  %v606 = vpack.c.b16 %v596, %v595
  %v607 = vpack.c.b16 %v598, %v597
  %v608 = vpack.c.b16 %v600, %v599
  %617 = vmatpush.bf16.msra.mxu0 %v608
  %618 = vmatpush.bf16.msra.mxu0 %v607
  %619 = vmatpush.bf16.msra.mxu0 %v606
  %620 = vmatpush.bf16.msra.mxu0 %v605
  %621 = vmatpush.bf16.msra.mxu0 %v604
  %622 = vmatpush.bf16.msra.mxu0 %v603
  %623 = vmatpush.bf16.msra.mxu0 %v602
  %624 = vmatpush.bf16.msra.mxu0 %v601
  %625 = vmatmul.bf16.gmra.mxu0 %v545
  %v626 = vpop.f32.mrf.mxu0
  %v627 = vadd.f32 0.0, %v626
  %v628 = vpop.f32.mrf.mxu0
  %v629 = vadd.f32 0.0, %v628
  %630 = vmatmul.bf16.gmra.mxu0 %v546
  %v631 = vpop.f32.mrf.mxu0
  %v632 = vadd.f32 0.0, %v631
  %v633 = vpop.f32.mrf.mxu0
  %v634 = vadd.f32 0.0, %v633
  %635 = vmatmul.bf16.gmra.mxu0 %v547
  %v636 = vpop.f32.mrf.mxu0
  %v637 = vadd.f32 0.0, %v636
  %v638 = vpop.f32.mrf.mxu0
  %v639 = vadd.f32 0.0, %v638
  %640 = vmatmul.bf16.gmra.mxu0 %v548
  %v641 = vpop.f32.mrf.mxu0
  %v642 = vadd.f32 0.0, %v641
  %v643 = vpop.f32.mrf.mxu0
  %v644 = vadd.f32 0.0, %v643
  %645 = vmatmul.bf16.gmra.mxu0 %v549
  %v646 = vpop.f32.mrf.mxu0
  %v647 = vadd.f32 0.0, %v646
  %v648 = vpop.f32.mrf.mxu0
  %v649 = vadd.f32 0.0, %v648
  %650 = vmatmul.bf16.gmra.mxu0 %v550
  %v651 = vpop.f32.mrf.mxu0
  %v652 = vadd.f32 0.0, %v651
  %v653 = vpop.f32.mrf.mxu0
  %v654 = vadd.f32 0.0, %v653
  %655 = vmatmul.bf16.gmra.mxu0 %v551
  %v656 = vpop.f32.mrf.mxu0
  %v657 = vadd.f32 0.0, %v656
  %v658 = vpop.f32.mrf.mxu0
  %v659 = vadd.f32 0.0, %v658
  %660 = vmatmul.bf16.gmra.mxu0 %v552
  %v661 = vpop.f32.mrf.mxu0
  %v662 = vadd.f32 0.0, %v661
  %v663 = vpop.f32.mrf.mxu0
  %v664 = vadd.f32 0.0, %v663
  %665 = vdwg.mxu0
  %v666 = vpack.c.bf16 %v629, %v627
  %v667 = vpack.c.bf16 %v634, %v632
  %v668 = vpack.c.bf16 %v639, %v637
  %v669 = vpack.c.bf16 %v644, %v642
  %v670 = vpack.c.bf16 %v649, %v647
  %v671 = vpack.c.bf16 %v654, %v652
  %v672 = vpack.c.bf16 %v659, %v657
  %v673 = vpack.c.bf16 %v664, %v662
  %v674 = vld [vmem:[%s7] sm:$0x1]
  %v676 = vperm.slane %v674, 0
  %678 = vmatpush.bf16.msra.mxu0 %v673
  %679 = vmatpush.bf16.msra.mxu0 %v672
  %680 = vmatpush.bf16.msra.mxu0 %v671
  %681 = vmatpush.bf16.msra.mxu0 %v670
  %682 = vmatpush.bf16.msra.mxu0 %v669
  %683 = vmatpush.bf16.msra.mxu0 %v668
  %684 = vmatpush.bf16.msra.mxu0 %v667
  %685 = vmatpush.bf16.msra.mxu0 %v666
  %686 = vmatmul.bf16.gmra.mxu0 %v266
  %v687 = vpop.f32.mrf.mxu0
  %v688 = vadd.f32 %v676, %v687
  %v689 = vpop.f32.mrf.mxu0
  %v690 = vadd.f32 %v676, %v689
  %691 = vmatmul.bf16.gmra.mxu0 %v267
  %v692 = vpop.f32.mrf.mxu0
  %v693 = vadd.f32 %v676, %v692
  %v694 = vpop.f32.mrf.mxu0
  %v695 = vadd.f32 %v676, %v694
  %696 = vmatmul.bf16.gmra.mxu0 %v268
  %v697 = vpop.f32.mrf.mxu0
  %v698 = vadd.f32 %v676, %v697
  %v699 = vpop.f32.mrf.mxu0
  %v700 = vadd.f32 %v676, %v699
  %701 = vmatmul.bf16.gmra.mxu0 %v269
  %v702 = vpop.f32.mrf.mxu0
  %v703 = vadd.f32 %v676, %v702
  %v704 = vpop.f32.mrf.mxu0
  %v705 = vadd.f32 %v676, %v704
  %706 = vmatmul.bf16.gmra.mxu0 %v270
  %v707 = vpop.f32.mrf.mxu0
  %v708 = vadd.f32 %v676, %v707
  %v709 = vpop.f32.mrf.mxu0
  %v710 = vadd.f32 %v676, %v709
  %711 = vmatmul.bf16.gmra.mxu0 %v271
  %v712 = vpop.f32.mrf.mxu0
  %v713 = vadd.f32 %v676, %v712
  %v714 = vpop.f32.mrf.mxu0
  %v715 = vadd.f32 %v676, %v714
  %716 = vmatmul.bf16.gmra.mxu0 %v272
  %v717 = vpop.f32.mrf.mxu0
  %v718 = vadd.f32 %v676, %v717
  %v719 = vpop.f32.mrf.mxu0
  %v720 = vadd.f32 %v676, %v719
  %721 = vmatmul.bf16.gmra.mxu0 %v273
  %v722 = vpop.f32.mrf.mxu0
  %v723 = vadd.f32 %v676, %v722
  %v724 = vpop.f32.mrf.mxu0
  %v725 = vadd.f32 %v676, %v724
  %726 = vdwg.mxu0
  %v727 = vxor.u32 %v688, 2147483648
  %v728 = vxor.u32 %v690, 2147483648
  %v729 = vxor.u32 %v693, 2147483648
  %v730 = vxor.u32 %v695, 2147483648
  %v731 = vxor.u32 %v698, 2147483648
  %v732 = vxor.u32 %v700, 2147483648
  %v733 = vxor.u32 %v703, 2147483648
  %v734 = vxor.u32 %v705, 2147483648
  %v735 = vxor.u32 %v708, 2147483648
  %v736 = vxor.u32 %v710, 2147483648
  %v737 = vxor.u32 %v713, 2147483648
  %v738 = vxor.u32 %v715, 2147483648
  %v739 = vxor.u32 %v718, 2147483648
  %v740 = vxor.u32 %v720, 2147483648
  %v741 = vxor.u32 %v723, 2147483648
  %v742 = vxor.u32 %v725, 2147483648
  %v743 = vmul.f32 %v727, 1.442695
  %v744 = vpow.pop %v743
  %v745 = vmul.f32 %v728, 1.442695
  %v746 = vpow.pop %v745
  %v747 = vmul.f32 %v729, 1.442695
  %v748 = vpow.pop %v747
  %v749 = vmul.f32 %v730, 1.442695
  %v750 = vpow.pop %v749
  %v751 = vmul.f32 %v731, 1.442695
  %v752 = vpow.pop %v751
  %v753 = vmul.f32 %v732, 1.442695
  %v754 = vpow.pop %v753
  %v755 = vmul.f32 %v733, 1.442695
  %v756 = vpow.pop %v755
  %v757 = vmul.f32 %v734, 1.442695
  %v758 = vpow.pop %v757
  %v759 = vmul.f32 %v735, 1.442695
  %v760 = vpow.pop %v759
  %v761 = vmul.f32 %v736, 1.442695
  %v762 = vpow.pop %v761
  %v763 = vmul.f32 %v737, 1.442695
  %v764 = vpow.pop %v763
  %v765 = vmul.f32 %v738, 1.442695
  %v766 = vpow.pop %v765
  %v767 = vmul.f32 %v739, 1.442695
  %v768 = vpow.pop %v767
  %v769 = vmul.f32 %v740, 1.442695
  %v770 = vpow.pop %v769
  %v771 = vmul.f32 %v741, 1.442695
  %v772 = vpow.pop %v771
  %v773 = vmul.f32 %v742, 1.442695
  %v774 = vpow.pop %v773
  %v775 = vadd.f32 %v744, 1.0
  %v776 = vadd.f32 %v746, 1.0
  %v777 = vadd.f32 %v748, 1.0
  %v778 = vadd.f32 %v750, 1.0
  %v779 = vadd.f32 %v752, 1.0
  %v780 = vadd.f32 %v754, 1.0
  %v781 = vadd.f32 %v756, 1.0
  %v782 = vadd.f32 %v758, 1.0
  %v783 = vadd.f32 %v760, 1.0
  %v784 = vadd.f32 %v762, 1.0
  %v785 = vadd.f32 %v764, 1.0
  %v786 = vadd.f32 %v766, 1.0
  %v787 = vadd.f32 %v768, 1.0
  %v788 = vadd.f32 %v770, 1.0
  %v789 = vadd.f32 %v772, 1.0
  %v790 = vadd.f32 %v774, 1.0
  %v791 = vrcp.pop %v775
  %v792 = vmul.f32 %v775, %v791
  %v793 = vsub.f32 1.0, %v792
  %v794 = vmul.f32 %v791, %v793
  %v795 = vadd.f32 %v791, %v794
  %vm796 = vweird.f32 %v775
  %vm797 = vweird.f32 %v791
  %vm798 = vmor %vm796, %vm797
  %v799 = vsel %vm798, %v791, %v795
  %v800 = vand.u32 2147483647, %v775
  %vm801 = vcmp.eq.f32.partialorder %v800, 8.507059e+37
  %v802 = vand.u32 %v775, 2147483648
  %v803 = vor.u32 1.1754944e-38, %v802
  %v804 = vsel %vm801, %v803, %v799
  %v805 = vmul.f32 1.0, %v804
  %v806 = vrcp.pop %v776
  %v807 = vmul.f32 %v776, %v806
  %v808 = vsub.f32 1.0, %v807
  %v809 = vmul.f32 %v806, %v808
  %v810 = vadd.f32 %v806, %v809
  %vm811 = vweird.f32 %v776
  %vm812 = vweird.f32 %v806
  %vm813 = vmor %vm811, %vm812
  %v814 = vsel %vm813, %v806, %v810
  %v815 = vand.u32 2147483647, %v776
  %vm816 = vcmp.eq.f32.partialorder %v815, 8.507059e+37
  %v817 = vand.u32 %v776, 2147483648
  %v818 = vor.u32 1.1754944e-38, %v817
  %v819 = vsel %vm816, %v818, %v814
  %v820 = vmul.f32 1.0, %v819
  %v821 = vrcp.pop %v777
  %v822 = vmul.f32 %v777, %v821
  %v823 = vsub.f32 1.0, %v822
  %v824 = vmul.f32 %v821, %v823
  %v825 = vadd.f32 %v821, %v824
  %vm826 = vweird.f32 %v777
  %vm827 = vweird.f32 %v821
  %vm828 = vmor %vm826, %vm827
  %v829 = vsel %vm828, %v821, %v825
  %v830 = vand.u32 2147483647, %v777
  %vm831 = vcmp.eq.f32.partialorder %v830, 8.507059e+37
  %v832 = vand.u32 %v777, 2147483648
  %v833 = vor.u32 1.1754944e-38, %v832
  %v834 = vsel %vm831, %v833, %v829
  %v835 = vmul.f32 1.0, %v834
  %v836 = vrcp.pop %v778
  %v837 = vmul.f32 %v778, %v836
  %v838 = vsub.f32 1.0, %v837
  %v839 = vmul.f32 %v836, %v838
  %v840 = vadd.f32 %v836, %v839
  %vm841 = vweird.f32 %v778
  %vm842 = vweird.f32 %v836
  %vm843 = vmor %vm841, %vm842
  %v844 = vsel %vm843, %v836, %v840
  %v845 = vand.u32 2147483647, %v778
  %vm846 = vcmp.eq.f32.partialorder %v845, 8.507059e+37
  %v847 = vand.u32 %v778, 2147483648
  %v848 = vor.u32 1.1754944e-38, %v847
  %v849 = vsel %vm846, %v848, %v844
  %v850 = vmul.f32 1.0, %v849
  %v851 = vrcp.pop %v779
  %v852 = vmul.f32 %v779, %v851
  %v853 = vsub.f32 1.0, %v852
  %v854 = vmul.f32 %v851, %v853
  %v855 = vadd.f32 %v851, %v854
  %vm856 = vweird.f32 %v779
  %vm857 = vweird.f32 %v851
  %vm858 = vmor %vm856, %vm857
  %v859 = vsel %vm858, %v851, %v855
  %v860 = vand.u32 2147483647, %v779
  %vm861 = vcmp.eq.f32.partialorder %v860, 8.507059e+37
  %v862 = vand.u32 %v779, 2147483648
  %v863 = vor.u32 1.1754944e-38, %v862
  %v864 = vsel %vm861, %v863, %v859
  %v865 = vmul.f32 1.0, %v864
  %v866 = vrcp.pop %v780
  %v867 = vmul.f32 %v780, %v866
  %v868 = vsub.f32 1.0, %v867
  %v869 = vmul.f32 %v866, %v868
  %v870 = vadd.f32 %v866, %v869
  %vm871 = vweird.f32 %v780
  %vm872 = vweird.f32 %v866
  %vm873 = vmor %vm871, %vm872
  %v874 = vsel %vm873, %v866, %v870
  %v875 = vand.u32 2147483647, %v780
  %vm876 = vcmp.eq.f32.partialorder %v875, 8.507059e+37
  %v877 = vand.u32 %v780, 2147483648
  %v878 = vor.u32 1.1754944e-38, %v877
  %v879 = vsel %vm876, %v878, %v874
  %v880 = vmul.f32 1.0, %v879
  %v881 = vrcp.pop %v781
  %v882 = vmul.f32 %v781, %v881
  %v883 = vsub.f32 1.0, %v882
  %v884 = vmul.f32 %v881, %v883
  %v885 = vadd.f32 %v881, %v884
  %vm886 = vweird.f32 %v781
  %vm887 = vweird.f32 %v881
  %vm888 = vmor %vm886, %vm887
  %v889 = vsel %vm888, %v881, %v885
  %v890 = vand.u32 2147483647, %v781
  %vm891 = vcmp.eq.f32.partialorder %v890, 8.507059e+37
  %v892 = vand.u32 %v781, 2147483648
  %v893 = vor.u32 1.1754944e-38, %v892
  %v894 = vsel %vm891, %v893, %v889
  %v895 = vmul.f32 1.0, %v894
  %v896 = vrcp.pop %v782
  %v897 = vmul.f32 %v782, %v896
  %v898 = vsub.f32 1.0, %v897
  %v899 = vmul.f32 %v896, %v898
  %v900 = vadd.f32 %v896, %v899
  %vm901 = vweird.f32 %v782
  %vm902 = vweird.f32 %v896
  %vm903 = vmor %vm901, %vm902
  %v904 = vsel %vm903, %v896, %v900
  %v905 = vand.u32 2147483647, %v782
  %vm906 = vcmp.eq.f32.partialorder %v905, 8.507059e+37
  %v907 = vand.u32 %v782, 2147483648
  %v908 = vor.u32 1.1754944e-38, %v907
  %v909 = vsel %vm906, %v908, %v904
  %v910 = vmul.f32 1.0, %v909
  %v911 = vrcp.pop %v783
  %v912 = vmul.f32 %v783, %v911
  %v913 = vsub.f32 1.0, %v912
  %v914 = vmul.f32 %v911, %v913
  %v915 = vadd.f32 %v911, %v914
  %vm916 = vweird.f32 %v783
  %vm917 = vweird.f32 %v911
  %vm918 = vmor %vm916, %vm917
  %v919 = vsel %vm918, %v911, %v915
  %v920 = vand.u32 2147483647, %v783
  %vm921 = vcmp.eq.f32.partialorder %v920, 8.507059e+37
  %v922 = vand.u32 %v783, 2147483648
  %v923 = vor.u32 1.1754944e-38, %v922
  %v924 = vsel %vm921, %v923, %v919
  %v925 = vmul.f32 1.0, %v924
  %v926 = vrcp.pop %v784
  %v927 = vmul.f32 %v784, %v926
  %v928 = vsub.f32 1.0, %v927
  %v929 = vmul.f32 %v926, %v928
  %v930 = vadd.f32 %v926, %v929
  %vm931 = vweird.f32 %v784
  %vm932 = vweird.f32 %v926
  %vm933 = vmor %vm931, %vm932
  %v934 = vsel %vm933, %v926, %v930
  %v935 = vand.u32 2147483647, %v784
  %vm936 = vcmp.eq.f32.partialorder %v935, 8.507059e+37
  %v937 = vand.u32 %v784, 2147483648
  %v938 = vor.u32 1.1754944e-38, %v937
  %v939 = vsel %vm936, %v938, %v934
  %v940 = vmul.f32 1.0, %v939
  %v941 = vrcp.pop %v785
  %v942 = vmul.f32 %v785, %v941
  %v943 = vsub.f32 1.0, %v942
  %v944 = vmul.f32 %v941, %v943
  %v945 = vadd.f32 %v941, %v944
  %vm946 = vweird.f32 %v785
  %vm947 = vweird.f32 %v941
  %vm948 = vmor %vm946, %vm947
  %v949 = vsel %vm948, %v941, %v945
  %v950 = vand.u32 2147483647, %v785
  %vm951 = vcmp.eq.f32.partialorder %v950, 8.507059e+37
  %v952 = vand.u32 %v785, 2147483648
  %v953 = vor.u32 1.1754944e-38, %v952
  %v954 = vsel %vm951, %v953, %v949
  %v955 = vmul.f32 1.0, %v954
  %v956 = vrcp.pop %v786
  %v957 = vmul.f32 %v786, %v956
  %v958 = vsub.f32 1.0, %v957
  %v959 = vmul.f32 %v956, %v958
  %v960 = vadd.f32 %v956, %v959
  %vm961 = vweird.f32 %v786
  %vm962 = vweird.f32 %v956
  %vm963 = vmor %vm961, %vm962
  %v964 = vsel %vm963, %v956, %v960
  %v965 = vand.u32 2147483647, %v786
  %vm966 = vcmp.eq.f32.partialorder %v965, 8.507059e+37
  %v967 = vand.u32 %v786, 2147483648
  %v968 = vor.u32 1.1754944e-38, %v967
  %v969 = vsel %vm966, %v968, %v964
  %v970 = vmul.f32 1.0, %v969
  %v971 = vrcp.pop %v787
  %v972 = vmul.f32 %v787, %v971
  %v973 = vsub.f32 1.0, %v972
  %v974 = vmul.f32 %v971, %v973
  %v975 = vadd.f32 %v971, %v974
  %vm976 = vweird.f32 %v787
  %vm977 = vweird.f32 %v971
  %vm978 = vmor %vm976, %vm977
  %v979 = vsel %vm978, %v971, %v975
  %v980 = vand.u32 2147483647, %v787
  %vm981 = vcmp.eq.f32.partialorder %v980, 8.507059e+37
  %v982 = vand.u32 %v787, 2147483648
  %v983 = vor.u32 1.1754944e-38, %v982
  %v984 = vsel %vm981, %v983, %v979
  %v985 = vmul.f32 1.0, %v984
  %v986 = vrcp.pop %v788
  %v987 = vmul.f32 %v788, %v986
  %v988 = vsub.f32 1.0, %v987
  %v989 = vmul.f32 %v986, %v988
  %v990 = vadd.f32 %v986, %v989
  %vm991 = vweird.f32 %v788
  %vm992 = vweird.f32 %v986
  %vm993 = vmor %vm991, %vm992
  %v994 = vsel %vm993, %v986, %v990
  %v995 = vand.u32 2147483647, %v788
  %vm996 = vcmp.eq.f32.partialorder %v995, 8.507059e+37
  %v997 = vand.u32 %v788, 2147483648
  %v998 = vor.u32 1.1754944e-38, %v997
  %v999 = vsel %vm996, %v998, %v994
  %v1000 = vmul.f32 1.0, %v999
  %v1001 = vrcp.pop %v789
  %v1002 = vmul.f32 %v789, %v1001
  %v1003 = vsub.f32 1.0, %v1002
  %v1004 = vmul.f32 %v1001, %v1003
  %v1005 = vadd.f32 %v1001, %v1004
  %vm1006 = vweird.f32 %v789
  %vm1007 = vweird.f32 %v1001
  %vm1008 = vmor %vm1006, %vm1007
  %v1009 = vsel %vm1008, %v1001, %v1005
  %v1010 = vand.u32 2147483647, %v789
  %vm1011 = vcmp.eq.f32.partialorder %v1010, 8.507059e+37
  %v1012 = vand.u32 %v789, 2147483648
  %v1013 = vor.u32 1.1754944e-38, %v1012
  %v1014 = vsel %vm1011, %v1013, %v1009
  %v1015 = vmul.f32 1.0, %v1014
  %v1016 = vrcp.pop %v790
  %v1017 = vmul.f32 %v790, %v1016
  %v1018 = vsub.f32 1.0, %v1017
  %v1019 = vmul.f32 %v1016, %v1018
  %v1020 = vadd.f32 %v1016, %v1019
  %vm1021 = vweird.f32 %v790
  %vm1022 = vweird.f32 %v1016
  %vm1023 = vmor %vm1021, %vm1022
  %v1024 = vsel %vm1023, %v1016, %v1020
  %v1025 = vand.u32 2147483647, %v790
  %vm1026 = vcmp.eq.f32.partialorder %v1025, 8.507059e+37
  %v1027 = vand.u32 %v790, 2147483648
  %v1028 = vor.u32 1.1754944e-38, %v1027
  %v1029 = vsel %vm1026, %v1028, %v1024
  %v1030 = vmul.f32 1.0, %v1029
  %1031 = vst [vmem:[%s8] sm:$0xff] %v805
  %1032 = vst [vmem:[%s8 + $0x8] sm:$0xff] %v820
  %1033 = vst [vmem:[%s8 + $0x10] sm:$0xff] %v835
  %1034 = vst [vmem:[%s8 + $0x18] sm:$0xff] %v850
  %1035 = vst [vmem:[%s8 + $0x20] sm:$0xff] %v865
  %1036 = vst [vmem:[%s8 + $0x28] sm:$0xff] %v880
  %1037 = vst [vmem:[%s8 + $0x30] sm:$0xff] %v895
  %1038 = vst [vmem:[%s8 + $0x38] sm:$0xff] %v910
  %1039 = vst [vmem:[%s8 + $0x40] sm:$0xff] %v925
  %1040 = vst [vmem:[%s8 + $0x48] sm:$0xff] %v940
  %1041 = vst [vmem:[%s8 + $0x50] sm:$0xff] %v955
  %1042 = vst [vmem:[%s8 + $0x58] sm:$0xff] %v970
  %1043 = vst [vmem:[%s8 + $0x60] sm:$0xff] %v985
  %1044 = vst [vmem:[%s8 + $0x68] sm:$0xff] %v1000
  %1045 = vst [vmem:[%s8 + $0x70] sm:$0xff] %v1015
  %1046 = vst [vmem:[%s8 + $0x78] sm:$0xff] %v1030
  // Predicated region
  $region34: #{ucgcn_forward.1} parent=0 // pred_check
    _
  $region35: #{ucgcn_forward.1} parent=0 // pred_check_branch
    %1048 = sbr.rel (0) target = $region37
  $region36: #{ucgcn_forward.1} parent=0 // pred_region
    _
  $region37: #{ucgcn_forward.1} parent=0 // pred_fallthru
    _
  // Predicated region
  $region38: #{ucgcn_forward.1} parent=0 // pred_check
    _
  $region39: #{ucgcn_forward.1} parent=0 // pred_check_branch
    %1050 = sbr.rel (0) target = $region41
  $region40: #{ucgcn_forward.1} parent=0 // pred_region
    _
  $region41: #{ucgcn_forward.1} parent=0 // pred_fallthru
    _

</llo_original>
